<compile_context>
chip_gen: v7x
topology: tpu7x:2x2x1
jax: 0.10.0
libtpu: 0.0.40
codegen_flags: <defaults>
</compile_context>

<pallas_src>
import functools

import jax
import jax.numpy as jnp
from jax.experimental import pallas as pl
from jax.experimental.pallas import tpu as pltpu

LEAKY_SLOPE = 0.01  # F.leaky_relu default negative_slope


def _leaky_relu(x):
    # For slope < 1, leaky_relu(x) == max(x, slope*x): vmul + vmax (no select).
    return jnp.maximum(x, LEAKY_SLOPE * x)


def _round_up(a, b):
    return ((a + b - 1) // b) * b


def mel2spec_fnn_kernel(x_ref, w1_ref, b1_ref, w2_ref, b2_ref, wp_ref, bp_ref, o_ref):
    """Fused 2-hidden-layer MLP: (tm, in) -> (tm, out) for one row tile.

    Operands are fed to the MXU in their stored dtype (bf16 stays bf16 on
    v6e/v7x); accumulation is forced to f32 via preferred_element_type and the
    activation math is done in f32.
    """
    x = x_ref[...]

    # Hidden layer 1: Linear + leaky_relu  (dropout p=0.0 -> no-op)
    h = jnp.dot(x, w1_ref[...], preferred_element_type=jnp.float32)
    h = _leaky_relu(h + b1_ref[...].astype(jnp.float32))

    # Hidden layer 2: Linear + leaky_relu  (dropout p=0.0 -> no-op)
    h = jnp.dot(h.astype(w2_ref.dtype), w2_ref[...], preferred_element_type=jnp.float32)
    h = _leaky_relu(h + b2_ref[...].astype(jnp.float32))

    # Final projection (no activation)
    o = jnp.dot(h.astype(wp_ref.dtype), wp_ref[...], preferred_element_type=jnp.float32)
    o = o + bp_ref[...].astype(jnp.float32)
    o_ref[...] = o.astype(o_ref.dtype)


@functools.partial(jax.jit, static_argnames=("tm",))
def mel2spec_fnn(x, w1, b1, w2, b2, wp, bp, *, tm=512):
    """x: (batch, seq_len, in_size) -> (batch, seq_len, out_size).

    tm: requested row tile (multiple of 8). Sweep 256-1024 on v6e/v7x,
    256-512 on v5e; it is clamped to round_up(M, 8) so small inputs use a
    single exact tile (no padding, no wasted compute).
    """
    B, S, in_size = x.shape
    h1 = w1.shape[1]
    h2 = w2.shape[1]
    out_size = wp.shape[1]
    M = B * S

    xf = x.reshape(M, in_size)

    # Effective row tile: multiple of 8 sublanes, no larger than (rounded-up) M.
    # Grid uses cdiv: if tm_eff does not divide M, Pallas masks the ragged last
    # block (row-wise independent compute, so out-of-bounds rows only feed
    # their own masked output rows). When M > tm the grid has >= 2 steps, so
    # the "parallel" axis can shard across both TensorCores on v7x.
    tm_eff = max(8, min(tm, _round_up(M, 8)))
    grid = (pl.cdiv(M, tm_eff),)

    flops = 2 * M * (in_size * h1 + h1 * h2 + h2 * out_size)
    bytes_accessed = (
        xf.size * xf.dtype.itemsize
        + sum(a.size * a.dtype.itemsize for a in (w1, b1, w2, b2, wp, bp))
        + M * out_size * x.dtype.itemsize
    )

    out = pl.pallas_call(
        mel2spec_fnn_kernel,
        out_shape=jax.ShapeDtypeStruct((M, out_size), x.dtype),
        grid_spec=pltpu.PrefetchScalarGridSpec(
            num_scalar_prefetch=0,
            grid=grid,
            in_specs=[
                pl.BlockSpec((tm_eff, in_size), lambda i: (i, 0)),  # activations (row tile)
                pl.BlockSpec((in_size, h1), lambda i: (0, 0)),      # W1 (resident)
                pl.BlockSpec((1, h1), lambda i: (0, 0)),            # b1
                pl.BlockSpec((h1, h2), lambda i: (0, 0)),           # W2 (resident)
                pl.BlockSpec((1, h2), lambda i: (0, 0)),            # b2
                pl.BlockSpec((h2, out_size), lambda i: (0, 0)),     # Wproj (resident)
                pl.BlockSpec((1, out_size), lambda i: (0, 0)),      # bproj
            ],
            out_specs=pl.BlockSpec((tm_eff, out_size), lambda i: (i, 0)),
        ),
        compiler_params=pltpu.CompilerParams(
            dimension_semantics=("parallel",),
        ),
        cost_estimate=pl.CostEstimate(
            flops=flops, transcendentals=0, bytes_accessed=bytes_accessed
        ),
    )(xf, w1, b1, w2, b2, wp, bp)

    return out.reshape(B, S, out_size)


def init_params(key, in_size, hid_sizes, out_size, dtype=jnp.float32):
    """Deterministic synthetic parameters; weights stored as (fan_in, fan_out)."""
    sizes = [in_size] + list(hid_sizes) + [out_size]
    params = []
    for li in range(len(sizes) - 1):
        key, kw, kb = jax.random.split(key, 3)
        fan_in, fan_out = sizes[li], sizes[li + 1]
        scale = 1.0 / jnp.sqrt(jnp.asarray(fan_in, dtype=jnp.float32))
        w = jax.random.uniform(kw, (fan_in, fan_out), dtype, -scale, scale)
        b = jax.random.uniform(kb, (1, fan_out), dtype, -scale, scale)
        params.append((w, b))
    return params


def reference_forward(x, params):
    B, S, in_size = x.shape
    res = x.reshape(B * S, in_size)
    for w, b in params[:-1]:
        res = jax.nn.leaky_relu(res @ w + b, negative_slope=LEAKY_SLOPE)
    wp, bp = params[-1]
    res = res @ wp + bp
    return res.reshape(B, S, -1)


if __name__ == "__main__":
    # Small shapes consistent with the module's forward:
    #   input (batch, seq_len, in_size) = (2, 8, 32)
    #   hid_sizes = [64, 64], out_size = 128, dropout = 0.0
    batch, seq_len = 2, 8
    in_size, hid_sizes, out_size = 32, [64, 64], 128

    key = jax.random.PRNGKey(0)
    key, kx = jax.random.split(key)
    x = jax.random.normal(kx, (batch, seq_len, in_size), jnp.float32)

    params = init_params(key, in_size, hid_sizes, out_size)
    (w1, b1), (w2, b2), (wp, bp) = params

    # f32 path (reference-exact semantics).
    y = mel2spec_fnn(x, w1, b1, w2, b2, wp, bp)
    y = jax.block_until_ready(y)

    y_ref = reference_forward(x, params)
    assert y.shape == (batch, seq_len, out_size), y.shape
    assert jnp.allclose(y, y_ref, atol=1e-4, rtol=1e-4), "f32 mismatch vs reference"

    # bf16 operand path (native bf16 MXU on v6e/v7x; f32 accumulation in-kernel).
    xb = x.astype(jnp.bfloat16)
    pb = [(w.astype(jnp.bfloat16), b.astype(jnp.bfloat16)) for w, b in params]
    (w1b, b1b), (w2b, b2b), (wpb, bpb) = pb
    yb = mel2spec_fnn(xb, w1b, b1b, w2b, b2b, wpb, bpb)
    yb = jax.block_until_ready(yb)
    assert jnp.allclose(yb.astype(jnp.float32), y_ref, atol=1e-1, rtol=1e-1), \
        "bf16 mismatch vs reference"

    print("KERNEL_OK")
</pallas_src>

<mosaic_0001>
module attributes {stable_mosaic.version = 11 : i64} {
  func.func @mel2spec_fnn_kernel(%arg0: i32, %arg1: memref<16x32xf32, #tpu.memory_space<vmem>>, %arg2: memref<32x64xf32, #tpu.memory_space<vmem>>, %arg3: memref<1x64xf32, #tpu.memory_space<vmem>>, %arg4: memref<64x64xf32, #tpu.memory_space<vmem>>, %arg5: memref<1x64xf32, #tpu.memory_space<vmem>>, %arg6: memref<64x128xf32, #tpu.memory_space<vmem>>, %arg7: memref<1x128xf32, #tpu.memory_space<vmem>>, %arg8: memref<16x128xf32, #tpu.memory_space<vmem>>) attributes {dimension_semantics = [#tpu.dimension_semantics<parallel>], iteration_bounds = array<i64: 1>, scalar_prefetch = 0 : i64, scratch_operands = 0 : i64, tpu.core_type = #tpu.core_type<tc>, window_params = [{transform_indices = @transform_0, window_bounds = array<i64: 16, 32>}, {pipeline_mode = #tpu.pipeline_mode<synchronous>, transform_indices = @transform_1, window_bounds = array<i64: 32, 64>}, {pipeline_mode = #tpu.pipeline_mode<synchronous>, transform_indices = @transform_2, window_bounds = array<i64: 1, 64>}, {pipeline_mode = #tpu.pipeline_mode<synchronous>, transform_indices = @transform_3, window_bounds = array<i64: 64, 64>}, {pipeline_mode = #tpu.pipeline_mode<synchronous>, transform_indices = @transform_4, window_bounds = array<i64: 1, 64>}, {pipeline_mode = #tpu.pipeline_mode<synchronous>, transform_indices = @transform_5, window_bounds = array<i64: 64, 128>}, {pipeline_mode = #tpu.pipeline_mode<synchronous>, transform_indices = @transform_6, window_bounds = array<i64: 1, 128>}, {transform_indices = @transform_7, window_bounds = array<i64: 16, 128>}]} {
    %c0 = arith.constant 0 : index
    %c0_0 = arith.constant 0 : index
    %0 = vector.load %arg1[%c0, %c0_0] : memref<16x32xf32, #tpu.memory_space<vmem>>, vector<16x32xf32>
    %c0_1 = arith.constant 0 : index
    %c0_2 = arith.constant 0 : index
    %1 = vector.load %arg2[%c0_1, %c0_2] : memref<32x64xf32, #tpu.memory_space<vmem>>, vector<32x64xf32>
    %cst = arith.constant dense<0.000000e+00> : vector<16x64xf32>
    %2 = tpu.matmul %0, %1, %cst {dimension_numbers = #tpu.dot_dimension_numbers<[1], [0], [0], [1], [0, 0, 1, 1], [], []>} : vector<16x32xf32>, vector<32x64xf32>, vector<16x64xf32> -> vector<16x64xf32>
    %c0_3 = arith.constant 0 : index
    %c0_4 = arith.constant 0 : index
    %3 = vector.load %arg3[%c0_3, %c0_4] : memref<1x64xf32, #tpu.memory_space<vmem>>, vector<1x64xf32>
    %4 = vector.broadcast %3 : vector<1x64xf32> to vector<16x64xf32>
    %5 = arith.addf %2, %4 : vector<16x64xf32>
    %cst_5 = arith.constant 0.00999999977 : f32
    %6 = vector.broadcast %cst_5 : f32 to vector<16x64xf32>
    %7 = arith.mulf %6, %5 : vector<16x64xf32>
    %8 = arith.maximumf %5, %7 : vector<16x64xf32>
    %c0_6 = arith.constant 0 : index
    %c0_7 = arith.constant 0 : index
    %9 = vector.load %arg4[%c0_6, %c0_7] : memref<64x64xf32, #tpu.memory_space<vmem>>, vector<64x64xf32>
    %cst_8 = arith.constant dense<0.000000e+00> : vector<16x64xf32>
    %10 = tpu.matmul %8, %9, %cst_8 {dimension_numbers = #tpu.dot_dimension_numbers<[1], [0], [0], [1], [0, 0, 1, 1], [], []>} : vector<16x64xf32>, vector<64x64xf32>, vector<16x64xf32> -> vector<16x64xf32>
    %c0_9 = arith.constant 0 : index
    %c0_10 = arith.constant 0 : index
    %11 = vector.load %arg5[%c0_9, %c0_10] : memref<1x64xf32, #tpu.memory_space<vmem>>, vector<1x64xf32>
    %12 = vector.broadcast %11 : vector<1x64xf32> to vector<16x64xf32>
    %13 = arith.addf %10, %12 : vector<16x64xf32>
    %cst_11 = arith.constant 0.00999999977 : f32
    %14 = vector.broadcast %cst_11 : f32 to vector<16x64xf32>
    %15 = arith.mulf %14, %13 : vector<16x64xf32>
    %16 = arith.maximumf %13, %15 : vector<16x64xf32>
    %c0_12 = arith.constant 0 : index
    %c0_13 = arith.constant 0 : index
    %17 = vector.load %arg6[%c0_12, %c0_13] : memref<64x128xf32, #tpu.memory_space<vmem>>, vector<64x128xf32>
    %cst_14 = arith.constant dense<0.000000e+00> : vector<16x128xf32>
    %18 = tpu.matmul %16, %17, %cst_14 {dimension_numbers = #tpu.dot_dimension_numbers<[1], [0], [0], [1], [0, 0, 1, 1], [], []>} : vector<16x64xf32>, vector<64x128xf32>, vector<16x128xf32> -> vector<16x128xf32>
    %c0_15 = arith.constant 0 : index
    %c0_16 = arith.constant 0 : index
    %19 = vector.load %arg7[%c0_15, %c0_16] : memref<1x128xf32, #tpu.memory_space<vmem>>, vector<1x128xf32>
    %20 = vector.broadcast %19 : vector<1x128xf32> to vector<16x128xf32>
    %21 = arith.addf %18, %20 : vector<16x128xf32>
    %c0_17 = arith.constant 0 : index
    %c0_18 = arith.constant 0 : index
    %22 = vector.load %arg8[%c0_17, %c0_18] : memref<16x128xf32, #tpu.memory_space<vmem>>, vector<16x128xf32>
    tpu.vector_store %arg8[%c0_17, %c0_18], %21 {strides = array<i32>} : memref<16x128xf32, #tpu.memory_space<vmem>>, vector<16x128xf32>,
    return
  }
  func.func @transform_0(%arg0: i32) -> (i32, i32) {
    %c0_i32 = arith.constant 0 : i32
    %c0_i32_0 = arith.constant 0 : i32
    return %arg0, %c0_i32 : i32, i32
  }
  func.func @transform_1(%arg0: i32) -> (i32, i32) {
    %c0_i32 = arith.constant 0 : i32
    %c0_i32_0 = arith.constant 0 : i32
    %c0_i32_1 = arith.constant 0 : i32
    return %c0_i32, %c0_i32_0 : i32, i32
  }
  func.func @transform_2(%arg0: i32) -> (i32, i32) {
    %c0_i32 = arith.constant 0 : i32
    %c0_i32_0 = arith.constant 0 : i32
    %c0_i32_1 = arith.constant 0 : i32
    return %c0_i32, %c0_i32_0 : i32, i32
  }
  func.func @transform_3(%arg0: i32) -> (i32, i32) {
    %c0_i32 = arith.constant 0 : i32
    %c0_i32_0 = arith.constant 0 : i32
    %c0_i32_1 = arith.constant 0 : i32
    return %c0_i32, %c0_i32_0 : i32, i32
  }
  func.func @transform_4(%arg0: i32) -> (i32, i32) {
    %c0_i32 = arith.constant 0 : i32
    %c0_i32_0 = arith.constant 0 : i32
    %c0_i32_1 = arith.constant 0 : i32
    return %c0_i32, %c0_i32_0 : i32, i32
  }
  func.func @transform_5(%arg0: i32) -> (i32, i32) {
    %c0_i32 = arith.constant 0 : i32
    %c0_i32_0 = arith.constant 0 : i32
    %c0_i32_1 = arith.constant 0 : i32
    return %c0_i32, %c0_i32_0 : i32, i32
  }
  func.func @transform_6(%arg0: i32) -> (i32, i32) {
    %c0_i32 = arith.constant 0 : i32
    %c0_i32_0 = arith.constant 0 : i32
    %c0_i32_1 = arith.constant 0 : i32
    return %c0_i32, %c0_i32_0 : i32, i32
  }
  func.func @transform_7(%arg0: i32) -> (i32, i32) {
    %c0_i32 = arith.constant 0 : i32
    %c0_i32_0 = arith.constant 0 : i32
    return %arg0, %c0_i32 : i32, i32
  }
}

</mosaic_0001>

<llo_original>
// kernel: mel2spec_fnn.1
$region0: #{mel2spec_fnn.1}
  #allocation0 [shape = 'u32[]', space=smem, size = 0x4, offset = 0x4, fixed_abs, tag = 'smem constant byte address 0x4 - core index']
  #allocation1 [shape = 'u32[144,128]{1,0:T(1,128)}', space=vmem, size = 0x12000, scoped, tag = 'internal scratch']
  %s0 = inlined_call_operand.hbm [shape: f32[16,32], index: 0, kind: input, shape index: {}]
  %s1 = inlined_call_operand.hbm [shape: f32[32,64], index: 1, kind: input, shape index: {}]
  %s2 = inlined_call_operand.vmem [shape: f32[1,64], index: 2, kind: input, shape index: {}]
  %s3 = inlined_call_operand.hbm [shape: f32[64,64], index: 3, kind: input, shape index: {}]
  %s4 = inlined_call_operand.vmem [shape: f32[1,64], index: 4, kind: input, shape index: {}]
  %s5 = inlined_call_operand.hbm [shape: f32[64,128], index: 5, kind: input, shape index: {}]
  %s6 = inlined_call_operand.vmem [shape: f32[1,128], index: 6, kind: input, shape index: {}]
  %s7 = inlined_call_operand.hbm [shape: f32[16,128], index: 7, kind: output, shape index: {}]
  %s8 = sld [smem:[#allocation0]]
  $region54: #{mel2spec_fnn.1} parent=0
    _
  %s10 = ssub.s32 1, %s8
  %s11 = scalar_select 0, %s10, %s8
  $region1: #{mel2spec_fnn.1} parent=0
    #allocation2 [shape = 'u8[8192]{0}', space=vmem, size = 0x2000, scoped, tag = 'input window, operand 0, single buffered']
    #allocation3 [shape = 's32[1]{0}', space=sflag, size = 0x4, scoped, tag = 'scoped memory for mel2spec_fnn.1']
    #allocation4 [shape = 's32[1]{0}', space=sflag, size = 0x4, scoped, tag = 'scoped memory for mel2spec_fnn.1']
    #allocation5 [shape = 'u8[16384]{0}', space=vmem, size = 0x4000, scoped, tag = 'input window, operand 1, single buffered']
    #allocation6 [shape = 's32[1]{0}', space=sflag, size = 0x4, scoped, tag = 'scoped memory for mel2spec_fnn.1']
    #allocation7 [shape = 'u8[32768]{0}', space=vmem, size = 0x8000, scoped, tag = 'input window, operand 3, single buffered']
    #allocation8 [shape = 'u8[32768]{0}', space=vmem, size = 0x8000, scoped, tag = 'input window, operand 5, single buffered']
    #allocation9 [shape = 's32[1]{0}', space=sflag, size = 0x4, scoped, tag = 'scoped memory for mel2spec_fnn.1']
    #allocation10 [shape = 'u8[8192]{0}', space=vmem, size = 0x2000, scoped, tag = 'output window, operand 0, single buffered']
    %12 = vsyncpa [#allocation3], 0
    %13 = vsyncpa [#allocation6], 0
    %14 = vsyncpa [#allocation9], 0
    %15 = vsyncpa [#allocation4], 0
    // Predicated region
    $region2: #{mel2spec_fnn.1} parent=1 // pred_check
      _
    $region3: #{mel2spec_fnn.1} parent=1 // pred_check_branch
      %17 = sbr.rel (0) target = $region5
    $region4: #{mel2spec_fnn.1} parent=1 // pred_region
      %s19 = ssub.s32 256, 256
      %20 = vsyncadd [#allocation3], %s19
      %s21 = sshll.u32 [#allocation2], 4
      %s22 = int_to_ptr.vmem [resolvable:$true] %s21
      %27 = dma.hbm_to_vmem [thread:$0]  %s0, 256, %s22, [#allocation3], 128, 128, 8
    $region5: #{mel2spec_fnn.1} parent=1 // pred_fallthru
      _
    // Predicated region
    $region6: #{mel2spec_fnn.1} parent=1 // pred_check
      _
    $region7: #{mel2spec_fnn.1} parent=1 // pred_check_branch
      %29 = sbr.rel (0) target = $region9
    $region8: #{mel2spec_fnn.1} parent=1 // pred_region
      %s31 = ssub.s32 512, 512
      %32 = vsyncadd [#allocation6], %s31
      %s33 = sshll.u32 [#allocation5], 4
      %s34 = int_to_ptr.vmem [resolvable:$true] %s33
      %39 = dma.hbm_to_vmem [thread:$0]  %s1, 512, %s34, [#allocation6], 128, 128, 8
    $region9: #{mel2spec_fnn.1} parent=1 // pred_fallthru
      _
    // Predicated region
    $region10: #{mel2spec_fnn.1} parent=1 // pred_check
      _
    $region11: #{mel2spec_fnn.1} parent=1 // pred_check_branch
      %41 = sbr.rel (0) target = $region13
    $region12: #{mel2spec_fnn.1} parent=1 // pred_region
      _
    $region13: #{mel2spec_fnn.1} parent=1 // pred_fallthru
      _
    // Predicated region
    $region14: #{mel2spec_fnn.1} parent=1 // pred_check
      _
    $region15: #{mel2spec_fnn.1} parent=1 // pred_check_branch
      %43 = sbr.rel (0) target = $region17
    $region16: #{mel2spec_fnn.1} parent=1 // pred_region
      %s45 = ssub.s32 1024, 1024
      %46 = vsyncadd [#allocation6], %s45
      %s47 = sshll.u32 [#allocation7], 4
      %s48 = int_to_ptr.vmem [resolvable:$true] %s47
      %53 = dma.hbm_to_vmem [thread:$0]  %s3, 1024, %s48, [#allocation6], 128, 128, 8
    $region17: #{mel2spec_fnn.1} parent=1 // pred_fallthru
      _
    // Predicated region
    $region18: #{mel2spec_fnn.1} parent=1 // pred_check
      _
    $region19: #{mel2spec_fnn.1} parent=1 // pred_check_branch
      %55 = sbr.rel (0) target = $region21
    $region20: #{mel2spec_fnn.1} parent=1 // pred_region
      _
    $region21: #{mel2spec_fnn.1} parent=1 // pred_fallthru
      _
    // Predicated region
    $region22: #{mel2spec_fnn.1} parent=1 // pred_check
      _
    $region23: #{mel2spec_fnn.1} parent=1 // pred_check_branch
      %57 = sbr.rel (0) target = $region25
    $region24: #{mel2spec_fnn.1} parent=1 // pred_region
      %s59 = ssub.s32 1024, 1024
      %60 = vsyncadd [#allocation9], %s59
      %s61 = sshll.u32 [#allocation8], 4
      %s62 = int_to_ptr.vmem [resolvable:$true] %s61
      %67 = dma.hbm_to_vmem [thread:$0]  %s5, 1024, %s62, [#allocation9], 128, 128, 8
    $region25: #{mel2spec_fnn.1} parent=1 // pred_fallthru
      _
    // Predicated region
    $region26: #{mel2spec_fnn.1} parent=1 // pred_check
      _
    $region27: #{mel2spec_fnn.1} parent=1 // pred_check_branch
      %69 = sbr.rel (0) target = $region29
    $region28: #{mel2spec_fnn.1} parent=1 // pred_region
      _
    $region29: #{mel2spec_fnn.1} parent=1 // pred_fallthru
      _
    // Predicated region
    $region30: #{mel2spec_fnn.1} parent=1 // pred_check
      _
    $region31: #{mel2spec_fnn.1} parent=1 // pred_check_branch
      %71 = sbr.rel (0) target = $region33
    $region32: #{mel2spec_fnn.1} parent=1 // pred_region
      %72 = dma.done [#allocation3], 256
    $region33: #{mel2spec_fnn.1} parent=1 // pred_fallthru
      _
    // Predicated region
    $region34: #{mel2spec_fnn.1} parent=1 // pred_check
      _
    $region35: #{mel2spec_fnn.1} parent=1 // pred_check_branch
      %74 = sbr.rel (0) target = $region37
    $region36: #{mel2spec_fnn.1} parent=1 // pred_region
      %75 = dma.done [#allocation6], 512
    $region37: #{mel2spec_fnn.1} parent=1 // pred_fallthru
      _
    // Predicated region
    $region38: #{mel2spec_fnn.1} parent=1 // pred_check
      _
    $region39: #{mel2spec_fnn.1} parent=1 // pred_check_branch
      %77 = sbr.rel (0) target = $region41
    $region40: #{mel2spec_fnn.1} parent=1 // pred_region
      %78 = dma.done [#allocation6], 1024
    $region41: #{mel2spec_fnn.1} parent=1 // pred_fallthru
      _
    // Predicated region
    $region42: #{mel2spec_fnn.1} parent=1 // pred_check
      _
    $region43: #{mel2spec_fnn.1} parent=1 // pred_check_branch
      %80 = sbr.rel (0) target = $region45
    $region44: #{mel2spec_fnn.1} parent=1 // pred_region
      %81 = dma.done [#allocation9], 1024
    $region45: #{mel2spec_fnn.1} parent=1 // pred_fallthru
      _
    %v82 = vld [vmem:[#allocation2] sm:$0xff]
    %v83 = vld [vmem:[#allocation2 + $0x8] sm:$0xff]
    %v84 = vld [vmem:[#allocation5] sm:$0xff]
    %v85 = vld [vmem:[#allocation5 + $0x8] sm:$0xff]
    %v86 = vld [vmem:[#allocation5 + $0x10] sm:$0xff]
    %v87 = vld [vmem:[#allocation5 + $0x18] sm:$0xff]
    %v88 = vld [vmem:[%s2] sm:$0x1]
    %v90 = vlaneseq
    %v91 = vshrl.u32 %v90, 7
    %v92 = vsub.s32 0, %v91
    %v93 = vrot.slane %v88, %v92
    %vm95 = vcmask 261120
    %v97 = vsel %vm95, %v82, 0
    %v100 = vsel %vm95, %v83, 0
    %102 = vmatprep.subr.mxu0 0.0
    %103 = vmatpush1.msra.mxu0 %v84
    %104 = vmatprep.subr.mxu0 0.0
    %105 = vmatpush1.msra.mxu0 %v85
    %106 = vmatprep.subr.mxu0 0.0
    %107 = vmatpush1.msra.mxu0 %v86
    %108 = vmatprep.subr.mxu0 0.0
    %109 = vmatpush1.msra.mxu0 %v87
    %110 = vmatprep.subr.mxu0 0.0
    %111 = vmatpush1.msra.mxu0 0.0
    %112 = vmatprep.subr.mxu0 0.0
    %113 = vmatpush1.msra.mxu0 0.0
    %114 = vmatprep.subr.mxu0 0.0
    %115 = vmatpush1.msra.mxu0 0.0
    %116 = vmatprep.subr.mxu0 0.0
    %117 = vmatpush1.msra.mxu0 0.0
    %118 = vmatprep.subr.mxu0 0.0
    %119 = vmatpush1.msra.mxu0 0.0
    %120 = vmatprep.subr.mxu0 0.0
    %121 = vmatpush1.msra.mxu0 0.0
    %122 = vmatprep.subr.mxu0 0.0
    %123 = vmatpush1.msra.mxu0 0.0
    %124 = vmatprep.subr.mxu0 0.0
    %125 = vmatpush1.msra.mxu0 0.0
    %126 = vmatprep.subr.mxu0 0.0
    %127 = vmatpush1.msra.mxu0 0.0
    %128 = vmatprep.subr.mxu0 0.0
    %129 = vmatpush1.msra.mxu0 0.0
    %130 = vmatprep.subr.mxu0 0.0
    %131 = vmatpush1.msra.mxu0 0.0
    %132 = vmatprep.subr.mxu0 0.0
    %133 = vmatpush1.msra.mxu0 0.0
    %134 = vmatprep.subr.mxu0 0.0
    %135 = vmatpush1.msra.mxu0 0.0
    %136 = vmatprep.subr.mxu0 0.0
    %137 = vmatpush1.msra.mxu0 0.0
    %138 = vmatprep.subr.mxu0 0.0
    %139 = vmatpush1.msra.mxu0 0.0
    %140 = vmatprep.subr.mxu0 0.0
    %141 = vmatpush1.msra.mxu0 0.0
    %142 = vmatprep.subr.mxu0 0.0
    %143 = vmatpush1.msra.mxu0 0.0
    %144 = vmatprep.subr.mxu0 0.0
    %145 = vmatpush1.msra.mxu0 0.0
    %146 = vmatprep.subr.mxu0 0.0
    %147 = vmatpush1.msra.mxu0 0.0
    %148 = vmatprep.subr.mxu0 0.0
    %149 = vmatpush1.msra.mxu0 0.0
    %150 = vmatprep.subr.mxu0 0.0
    %151 = vmatpush1.msra.mxu0 0.0
    %152 = vmatprep.subr.mxu0 0.0
    %153 = vmatpush1.msra.mxu0 0.0
    %154 = vmatprep.subr.mxu0 0.0
    %155 = vmatpush1.msra.mxu0 0.0
    %156 = vmatprep.subr.mxu0 0.0
    %157 = vmatpush1.msra.mxu0 0.0
    %158 = vmatprep.subr.mxu0 0.0
    %159 = vmatpush1.msra.mxu0 0.0
    %160 = vmatprep.subr.mxu0 0.0
    %161 = vmatpush1.msra.mxu0 0.0
    %162 = vmatprep.subr.mxu0 0.0
    %163 = vmatpush1.msra.mxu0 0.0
    %164 = vmatprep.subr.mxu0 0.0
    %165 = vmatpush1.msra.mxu0 0.0
    %166 = vmatprep.mubr.f32.mxu0 0.0
    %167 = vmatmul.mubr.f32.gmra.mrb[0].mxu0 %v97
    %v168 = vpop.f32.mrb[0].mxu0
    %v169 = vadd.f32 %v93, %v168
    %v170 = vpop.f32.mrb[0].mxu0
    %171 = vmatprep.mubr.f32.mxu0 0.0
    %172 = vmatmul.mubr.f32.gmra.mrb[0].mxu0 %v100
    %v173 = vpop.f32.mrb[0].mxu0
    %v174 = vadd.f32 %v93, %v173
    %v175 = vpop.f32.mrb[0].mxu0
    %176 = vdwg.mxu0
    %v177 = vmul.f32 %v169, 0.01
    %v178 = vmul.f32 %v174, 0.01
    %v179 = vmax.f32 %v169, %v177
    %v180 = vmax.f32 %v174, %v178
    %v181 = vld [vmem:[#allocation7] sm:$0xff]
    %v182 = vld [vmem:[#allocation7 + $0x8] sm:$0xff]
    %v183 = vld [vmem:[#allocation7 + $0x10] sm:$0xff]
    %v184 = vld [vmem:[#allocation7 + $0x18] sm:$0xff]
    %v185 = vld [vmem:[#allocation7 + $0x20] sm:$0xff]
    %v186 = vld [vmem:[#allocation7 + $0x28] sm:$0xff]
    %v187 = vld [vmem:[#allocation7 + $0x30] sm:$0xff]
    %v188 = vld [vmem:[#allocation7 + $0x38] sm:$0xff]
    %v189 = vld [vmem:[%s4] sm:$0x1]
    %v191 = vlaneseq
    %v192 = vshrl.u32 %v191, 7
    %v193 = vsub.s32 0, %v192
    %v194 = vrot.slane %v189, %v193
    %vm196 = vcmask 523264
    %v198 = vsel %vm196, %v179, 0
    %v201 = vsel %vm196, %v180, 0
    %203 = vmatprep.subr.mxu0 0.0
    %204 = vmatpush1.msra.mxu0 %v181
    %205 = vmatprep.subr.mxu0 0.0
    %206 = vmatpush1.msra.mxu0 %v182
    %207 = vmatprep.subr.mxu0 0.0
    %208 = vmatpush1.msra.mxu0 %v183
    %209 = vmatprep.subr.mxu0 0.0
    %210 = vmatpush1.msra.mxu0 %v184
    %211 = vmatprep.subr.mxu0 0.0
    %212 = vmatpush1.msra.mxu0 %v185
    %213 = vmatprep.subr.mxu0 0.0
    %214 = vmatpush1.msra.mxu0 %v186
    %215 = vmatprep.subr.mxu0 0.0
    %216 = vmatpush1.msra.mxu0 %v187
    %217 = vmatprep.subr.mxu0 0.0
    %218 = vmatpush1.msra.mxu0 %v188
    %219 = vmatprep.subr.mxu0 0.0
    %220 = vmatpush1.msra.mxu0 0.0
    %221 = vmatprep.subr.mxu0 0.0
    %222 = vmatpush1.msra.mxu0 0.0
    %223 = vmatprep.subr.mxu0 0.0
    %224 = vmatpush1.msra.mxu0 0.0
    %225 = vmatprep.subr.mxu0 0.0
    %226 = vmatpush1.msra.mxu0 0.0
    %227 = vmatprep.subr.mxu0 0.0
    %228 = vmatpush1.msra.mxu0 0.0
    %229 = vmatprep.subr.mxu0 0.0
    %230 = vmatpush1.msra.mxu0 0.0
    %231 = vmatprep.subr.mxu0 0.0
    %232 = vmatpush1.msra.mxu0 0.0
    %233 = vmatprep.subr.mxu0 0.0
    %234 = vmatpush1.msra.mxu0 0.0
    %235 = vmatprep.subr.mxu0 0.0
    %236 = vmatpush1.msra.mxu0 0.0
    %237 = vmatprep.subr.mxu0 0.0
    %238 = vmatpush1.msra.mxu0 0.0
    %239 = vmatprep.subr.mxu0 0.0
    %240 = vmatpush1.msra.mxu0 0.0
    %241 = vmatprep.subr.mxu0 0.0
    %242 = vmatpush1.msra.mxu0 0.0
    %243 = vmatprep.subr.mxu0 0.0
    %244 = vmatpush1.msra.mxu0 0.0
    %245 = vmatprep.subr.mxu0 0.0
    %246 = vmatpush1.msra.mxu0 0.0
    %247 = vmatprep.subr.mxu0 0.0
    %248 = vmatpush1.msra.mxu0 0.0
    %249 = vmatprep.subr.mxu0 0.0
    %250 = vmatpush1.msra.mxu0 0.0
    %251 = vmatprep.subr.mxu0 0.0
    %252 = vmatpush1.msra.mxu0 0.0
    %253 = vmatprep.subr.mxu0 0.0
    %254 = vmatpush1.msra.mxu0 0.0
    %255 = vmatprep.subr.mxu0 0.0
    %256 = vmatpush1.msra.mxu0 0.0
    %257 = vmatprep.subr.mxu0 0.0
    %258 = vmatpush1.msra.mxu0 0.0
    %259 = vmatprep.subr.mxu0 0.0
    %260 = vmatpush1.msra.mxu0 0.0
    %261 = vmatprep.subr.mxu0 0.0
    %262 = vmatpush1.msra.mxu0 0.0
    %263 = vmatprep.subr.mxu0 0.0
    %264 = vmatpush1.msra.mxu0 0.0
    %265 = vmatprep.subr.mxu0 0.0
    %266 = vmatpush1.msra.mxu0 0.0
    %267 = vmatprep.mubr.f32.mxu0 0.0
    %268 = vmatmul.mubr.f32.gmra.mrb[0].mxu0 %v198
    %v269 = vpop.f32.mrb[0].mxu0
    %v270 = vadd.f32 %v194, %v269
    %v271 = vpop.f32.mrb[0].mxu0
    %272 = vmatprep.mubr.f32.mxu0 0.0
    %273 = vmatmul.mubr.f32.gmra.mrb[0].mxu0 %v201
    %v274 = vpop.f32.mrb[0].mxu0
    %v275 = vadd.f32 %v194, %v274
    %v276 = vpop.f32.mrb[0].mxu0
    %277 = vdwg.mxu0
    %v278 = vmul.f32 %v270, 0.01
    %v279 = vmul.f32 %v275, 0.01
    %v280 = vmax.f32 %v270, %v278
    %v281 = vmax.f32 %v275, %v279
    %v282 = vld [vmem:[#allocation8] sm:$0xff]
    %v283 = vld [vmem:[#allocation8 + $0x8] sm:$0xff]
    %v284 = vld [vmem:[#allocation8 + $0x10] sm:$0xff]
    %v285 = vld [vmem:[#allocation8 + $0x18] sm:$0xff]
    %v286 = vld [vmem:[#allocation8 + $0x20] sm:$0xff]
    %v287 = vld [vmem:[#allocation8 + $0x28] sm:$0xff]
    %v288 = vld [vmem:[#allocation8 + $0x30] sm:$0xff]
    %v289 = vld [vmem:[#allocation8 + $0x38] sm:$0xff]
    %v290 = vld [vmem:[%s6] sm:$0x1]
    %v292 = vlaneseq
    %v293 = vshrl.u32 %v292, 7
    %v294 = vsub.s32 0, %v293
    %v295 = vrot.slane %v290, %v294
    %v298 = vsel %vm196, %v280, 0
    %v301 = vsel %vm196, %v281, 0
    %303 = vmatprep.subr.mxu0 0.0
    %304 = vmatpush1.msra.mxu0 %v282
    %305 = vmatprep.subr.mxu0 0.0
    %306 = vmatpush1.msra.mxu0 %v283
    %307 = vmatprep.subr.mxu0 0.0
    %308 = vmatpush1.msra.mxu0 %v284
    %309 = vmatprep.subr.mxu0 0.0
    %310 = vmatpush1.msra.mxu0 %v285
    %311 = vmatprep.subr.mxu0 0.0
    %312 = vmatpush1.msra.mxu0 %v286
    %313 = vmatprep.subr.mxu0 0.0
    %314 = vmatpush1.msra.mxu0 %v287
    %315 = vmatprep.subr.mxu0 0.0
    %316 = vmatpush1.msra.mxu0 %v288
    %317 = vmatprep.subr.mxu0 0.0
    %318 = vmatpush1.msra.mxu0 %v289
    %319 = vmatprep.subr.mxu0 0.0
    %320 = vmatpush1.msra.mxu0 0.0
    %321 = vmatprep.subr.mxu0 0.0
    %322 = vmatpush1.msra.mxu0 0.0
    %323 = vmatprep.subr.mxu0 0.0
    %324 = vmatpush1.msra.mxu0 0.0
    %325 = vmatprep.subr.mxu0 0.0
    %326 = vmatpush1.msra.mxu0 0.0
    %327 = vmatprep.subr.mxu0 0.0
    %328 = vmatpush1.msra.mxu0 0.0
    %329 = vmatprep.subr.mxu0 0.0
    %330 = vmatpush1.msra.mxu0 0.0
    %331 = vmatprep.subr.mxu0 0.0
    %332 = vmatpush1.msra.mxu0 0.0
    %333 = vmatprep.subr.mxu0 0.0
    %334 = vmatpush1.msra.mxu0 0.0
    %335 = vmatprep.subr.mxu0 0.0
    %336 = vmatpush1.msra.mxu0 0.0
    %337 = vmatprep.subr.mxu0 0.0
    %338 = vmatpush1.msra.mxu0 0.0
    %339 = vmatprep.subr.mxu0 0.0
    %340 = vmatpush1.msra.mxu0 0.0
    %341 = vmatprep.subr.mxu0 0.0
    %342 = vmatpush1.msra.mxu0 0.0
    %343 = vmatprep.subr.mxu0 0.0
    %344 = vmatpush1.msra.mxu0 0.0
    %345 = vmatprep.subr.mxu0 0.0
    %346 = vmatpush1.msra.mxu0 0.0
    %347 = vmatprep.subr.mxu0 0.0
    %348 = vmatpush1.msra.mxu0 0.0
    %349 = vmatprep.subr.mxu0 0.0
    %350 = vmatpush1.msra.mxu0 0.0
    %351 = vmatprep.subr.mxu0 0.0
    %352 = vmatpush1.msra.mxu0 0.0
    %353 = vmatprep.subr.mxu0 0.0
    %354 = vmatpush1.msra.mxu0 0.0
    %355 = vmatprep.subr.mxu0 0.0
    %356 = vmatpush1.msra.mxu0 0.0
    %357 = vmatprep.subr.mxu0 0.0
    %358 = vmatpush1.msra.mxu0 0.0
    %359 = vmatprep.subr.mxu0 0.0
    %360 = vmatpush1.msra.mxu0 0.0
    %361 = vmatprep.subr.mxu0 0.0
    %362 = vmatpush1.msra.mxu0 0.0
    %363 = vmatprep.subr.mxu0 0.0
    %364 = vmatpush1.msra.mxu0 0.0
    %365 = vmatprep.subr.mxu0 0.0
    %366 = vmatpush1.msra.mxu0 0.0
    %367 = vmatprep.mubr.f32.mxu0 0.0
    %368 = vmatmul.mubr.f32.gmra.mrb[0].mxu0 %v298
    %v369 = vpop.f32.mrb[0].mxu0
    %v370 = vadd.f32 %v295, %v369
    %v371 = vpop.f32.mrb[0].mxu0
    %372 = vmatprep.mubr.f32.mxu0 0.0
    %373 = vmatmul.mubr.f32.gmra.mrb[0].mxu0 %v301
    %v374 = vpop.f32.mrb[0].mxu0
    %v375 = vadd.f32 %v295, %v374
    %v376 = vpop.f32.mrb[0].mxu0
    %377 = vdwg.mxu0
    %378 = vst [vmem:[#allocation10] sm:$0xff] %v370
    %379 = vst [vmem:[#allocation10 + $0x8] sm:$0xff] %v375
    // Predicated region
    $region46: #{mel2spec_fnn.1} parent=1 // pred_check
      _
    $region47: #{mel2spec_fnn.1} parent=1 // pred_check_branch
      %381 = sbr.rel (0) target = $region49
    $region48: #{mel2spec_fnn.1} parent=1 // pred_region
      %s383 = ssub.s32 256, 256
      %384 = vsyncadd [#allocation4], %s383
      %s385 = sshll.u32 [#allocation10], 4
      %s386 = int_to_ptr.vmem [resolvable:$true] %s385
      %391 = dma.vmem_to_hbm [thread:$0]  %s386, 256, %s7, [#allocation4], 128, 128, 8
    $region49: #{mel2spec_fnn.1} parent=1 // pred_fallthru
      _
    // Predicated region
    $region50: #{mel2spec_fnn.1} parent=1 // pred_check
      _
    $region51: #{mel2spec_fnn.1} parent=1 // pred_check_branch
      %393 = sbr.rel (0) target = $region53
    $region52: #{mel2spec_fnn.1} parent=1 // pred_region
      %394 = dma.done [#allocation4], 256
    $region53: #{mel2spec_fnn.1} parent=1 // pred_fallthru
      _
    %395 = vsyncpa [#allocation3], 1
    %396 = vsyncpa [#allocation6], 1
    %397 = vsyncpa [#allocation9], 1
    %398 = vsyncpa [#allocation4], 1

</llo_original>
